<compile_context>
chip_gen: v7x
topology: tpu7x:2x2x1
jax: 0.10.0
libtpu: 0.0.40
codegen_flags: <defaults>
</compile_context>

<pallas_src>
import functools

import jax
import jax.numpy as jnp
from jax import lax
from jax.experimental import pallas as pl
from jax.experimental.pallas import tpu as pltpu


# Below this channel/feature width the systolic array is latency dominated;
# use VPU broadcast-multiply-adds instead of the MXU.
_MXU_MIN_K = 64

# Pool tiling budgets.
_POOL_CHUNK_CAP = 16384        # lanes per chunk; bounds the unrolled add count
_POOL_BUF_BUDGET = 8 << 20     # bytes per (single) pool input buffer
_HEAD_W_BUDGET = 8 << 20       # bytes per (single) W tile buffer
_MAX_TAG_TILE = 2048


# --------------------------------------------------------------------------
# Kernel 1: global average pool (spatial-sum reduction over a flat 2-D slab)
# --------------------------------------------------------------------------
def _pool_kernel(x_ref, pooled_ref, acc_ref, *, hw, chunk, inv_hw):
    """Accumulate one spatial chunk; finalize with a single cross-lane reduce.

    x_ref      : (row_block, chunk)  one spatial chunk of the flattened image
    pooled_ref : (row_block, 1)      mean output (written in finalize only)
    acc_ref    : (row_block, 128)    f32 lane-wide VPU accumulator (scratch)
    """
    step = pl.program_id(1)
    last = pl.num_programs(1) - 1

    @pl.when(step == 0)
    def _():
        acc_ref[...] = jnp.zeros_like(acc_ref)

    rb = acc_ref.shape[0]
    rem = hw % chunk                      # static; 0 for the common case
    if rem:
        lane = lax.broadcasted_iota(jnp.int32, (rb, 128), 1)
        valid = jnp.where(step == last, rem, chunk)

    # Pure VPU vreg adds over 128-lane slices (no XLU work in the hot loop,
    # no full-chunk f32 temporary).
    part = jnp.zeros((rb, 128), jnp.float32)
    for i in range(chunk // 128):
        piece = x_ref[:, i * 128:(i + 1) * 128].astype(jnp.float32)
        if rem:
            piece = jnp.where(lane + (i * 128) < valid, piece, 0.0)
        part = part + piece
    acc_ref[...] += part

    @pl.when(step == last)
    def _():
        # Single XLU cross-lane reduce + fold the 1/(H*W) pool scale here so
        # W never has to be rescaled (it is streamed untouched by the head).
        pooled_ref[...] = jnp.sum(acc_ref[...], axis=-1, keepdims=True) * inv_hw


# --------------------------------------------------------------------------
# Kernel 2: tag projection, lane-dense tiles over the tag axis
# --------------------------------------------------------------------------
def _head_kernel(pooled_ref, w_ref, b_ref, o_ref):
    """One grid step writes one lane-dense tag tile: pooled @ w_tile + b_tile.

    pooled_ref : (N, C)   pooled (already averaged) features, f32
    w_ref      : (C, TT)  tag tile of the projection weight (f32 or bf16)
    b_ref      : (1, TT)  tag tile of the bias (f32)
    o_ref      : (N, TT)  tag tile of the output logits (f32)
    """
    pooled = pooled_ref[...]                        # (N, C) f32
    w = w_ref[...]                                  # (C, TT) native dtype
    b = b_ref[...]                                  # (1, TT) f32
    n, c = pooled.shape

    if c >= _MXU_MIN_K:
        # Wide feature dim: feed the MXU in W's dtype (bf16 halves HBM bytes),
        # accumulate in f32.
        o_ref[...] = jnp.dot(pooled.astype(w.dtype), w,
                             preferred_element_type=jnp.float32) + b
    else:
        # Tiny K (raw image channels): a handful of VPU broadcast-FMAs beats a
        # near-empty MXU pass.  C is static, so this loop unrolls at trace time.
        w32 = w.astype(jnp.float32)
        acc = pooled[:, 0:1] * w32[0:1, :]
        for ci in range(1, c):
            acc = acc + pooled[:, ci:ci + 1] * w32[ci:ci + 1, :]
        o_ref[...] = acc + b


# --------------------------------------------------------------------------
# Tile-size choosers (byte-budgeted, generation-safe)
# --------------------------------------------------------------------------
def _choose_row_block(rows, sub, target_rows):
    """Largest divisor of `rows` that is a multiple of `sub` and <= target."""
    if rows <= target_rows or rows % sub != 0:
        return rows                       # full extent is always legal
    blk = max(sub, (min(target_rows, rows) // sub) * sub)
    while blk > sub:
        if rows % blk == 0:
            return blk
        blk -= sub
    return sub


def _choose_pool_tiles(rows, hw, itemsize, budget=_POOL_BUF_BUDGET):
    sub = max(8, 32 // itemsize)          # sublane multiple: 8 f32, 16 bf16
    target_rows = max(sub, budget // (_POOL_CHUNK_CAP * itemsize))
    if rows >= 2 * sub and rows % sub == 0:
        # Prefer >=2 row blocks so the 'parallel' axis can use both v7x cores.
        target_rows = min(target_rows, max(sub, rows // 2))
    row_block = _choose_row_block(rows, sub, target_rows)

    hw_lane = pl.cdiv(hw, 128) * 128
    chunk = budget // (row_block * itemsize)
    chunk = max(128, min((chunk // 128) * 128, _POOL_CHUNK_CAP, hw_lane))
    # Prefer a chunk that divides hw exactly (compiles the tail mask away).
    c = chunk
    while c >= max(128, chunk // 2):
        if hw % c == 0:
            return row_block, c
        c -= 128
    return row_block, chunk


def _choose_tag_tile(c, itemsize, t, budget_bytes=_HEAD_W_BUDGET,
                     max_tile=_MAX_TAG_TILE):
    tile = max(128, min(max_tile, pl.cdiv(t, 128) * 128))
    while tile > 128 and c * tile * itemsize > budget_bytes:
        tile -= 128
    return tile


# --------------------------------------------------------------------------
# Model-load-time parameter prep (runs ONCE, outside the jitted forward):
# optional bf16 conversion of W and tag-dim padding happen here so the jitted
# forward never materializes an extra HBM copy of the largest tensor.
# --------------------------------------------------------------------------
def prepare_head_params(w, b, *, param_dtype=None):
    c, t = w.shape
    if param_dtype is not None:
        w = w.astype(param_dtype)
    itemsize = jnp.dtype(w.dtype).itemsize
    tag_tile = _choose_tag_tile(c, itemsize, t)
    t_pad = pl.cdiv(t, tag_tile) * tag_tile
    b = b.astype(jnp.float32)
    if t_pad != t:
        w = jnp.pad(w, ((0, 0), (0, t_pad - t)))
        b = jnp.pad(b, (0, t_pad - t))
    return {
        "w": w,                             # (C, T_pad), untouched per call
        "b": b.reshape(1, t_pad),           # (1, T_pad) f32
        "tag_tile": int(tag_tile),
        "num_tags": int(t),
    }


# --------------------------------------------------------------------------
# Jitted forward
# --------------------------------------------------------------------------
@functools.partial(jax.jit, static_argnames=("num_tags", "tag_tile"))
def vision_model_forward(image_nchw, w, b2, *, num_tags, tag_tile):
    """image_nchw: (N, C, H, W); w: (C, T_pad); b2: (1, T_pad) -> {'tags'}."""
    n, c, h, w_sp = image_nchw.shape
    hw = h * w_sp
    rows = n * c
    t_pad = w.shape[1]
    assert t_pad % tag_tile == 0

    # ---- Kernel 1: global average pool over a flat (N*C, HW) slab ----------
    x = image_nchw.reshape(rows, hw)           # free, row-major reshape
    x_itemsize = jnp.dtype(x.dtype).itemsize
    row_block, chunk = _choose_pool_tiles(rows, hw, x_itemsize)
    n_row_blocks = pl.cdiv(rows, row_block)
    n_chunks = pl.cdiv(hw, chunk)

    pool_vmem = int(2 * row_block * chunk * x_itemsize   # double-buffered input
                    + row_block * 128 * 4                # lane accumulator
                    + 2 * row_block * 4                  # pooled output tile
                    + (4 << 20))                         # headroom
    pool_vmem = max(pool_vmem, 16 << 20)

    pooled = pl.pallas_call(
        functools.partial(_pool_kernel, hw=hw, chunk=chunk,
                          inv_hw=1.0 / float(hw)),
        out_shape=jax.ShapeDtypeStruct((rows, 1), jnp.float32),
        grid_spec=pltpu.PrefetchScalarGridSpec(
            num_scalar_prefetch=0,
            grid=(n_row_blocks, n_chunks),
            in_specs=[pl.BlockSpec((row_block, chunk), lambda i, s: (i, s))],
            out_specs=pl.BlockSpec((row_block, 1), lambda i, s: (i, 0)),
            scratch_shapes=[pltpu.VMEM((row_block, 128), jnp.float32)],
        ),
        compiler_params=pltpu.CompilerParams(
            dimension_semantics=("parallel", "arbitrary"),
            vmem_limit_bytes=pool_vmem,
        ),
        cost_estimate=pl.CostEstimate(
            flops=int(rows * hw),
            transcendentals=0,
            bytes_accessed=int(rows * hw * x_itemsize + rows * 4),
        ),
    )(x)

    pooled = pooled.reshape(n, c)              # already scaled by 1/(H*W)

    # ---- Kernel 2: tag projection, lane-dense tiles over the tag axis ------
    w_itemsize = jnp.dtype(w.dtype).itemsize
    head_vmem = int(2 * c * tag_tile * w_itemsize        # double-buffered W tile
                    + 2 * n * tag_tile * 4                # output tile
                    + 2 * tag_tile * 4                    # bias tile
                    + 2 * n * c * 4                       # pooled
                    + (4 << 20))
    head_vmem = max(head_vmem, 16 << 20)

    tags = pl.pallas_call(
        _head_kernel,
        out_shape=jax.ShapeDtypeStruct((n, t_pad), jnp.float32),
        grid_spec=pltpu.PrefetchScalarGridSpec(
            num_scalar_prefetch=0,
            grid=(t_pad // tag_tile,),
            in_specs=[
                pl.BlockSpec((n, c), lambda j: (0, 0)),
                pl.BlockSpec((c, tag_tile), lambda j: (0, j)),
                pl.BlockSpec((1, tag_tile), lambda j: (0, j)),
            ],
            out_specs=pl.BlockSpec((n, tag_tile), lambda j: (0, j)),
        ),
        compiler_params=pltpu.CompilerParams(
            dimension_semantics=("parallel",),
            vmem_limit_bytes=head_vmem,
        ),
        cost_estimate=pl.CostEstimate(
            flops=int(2 * n * c * t_pad),
            transcendentals=0,
            bytes_accessed=int(c * t_pad * w_itemsize + n * t_pad * 4
                               + n * c * 4 + t_pad * 4),
        ),
    )(pooled, w, b2)

    if t_pad != num_tags:
        tags = tags[:, :num_tags]
    return {"tags": tags}


if __name__ == "__main__":
    # Small config consistent with VisionModel's forward contract:
    #   batch['image'] (N, C, H, W) -> {'tags': (N, num_tags)}.
    config = {"image_size": 16, "num_tags": 512}

    N, C = 2, 4
    H = Wd = config["image_size"]
    T = config["num_tags"]

    key = jax.random.PRNGKey(0)
    k_img, k_w, k_b = jax.random.split(key, 3)

    image = jax.random.normal(k_img, (N, C, H, Wd), dtype=jnp.float32)  # NCHW
    w_proj = jax.random.normal(k_w, (C, T), dtype=jnp.float32) * 0.02
    b_proj = jax.random.normal(k_b, (T,), dtype=jnp.float32) * 0.01

    # ---- f32 path: tight numerical check against a plain-JAX reference -----
    params = prepare_head_params(w_proj, b_proj)
    out = vision_model_forward(image, params["w"], params["b"],
                               num_tags=params["num_tags"],
                               tag_tile=params["tag_tile"])
    tags = jax.block_until_ready(out["tags"])

    pooled_ref = jnp.mean(image.reshape(N, C, H * Wd), axis=-1)
    ref = pooled_ref @ w_proj + b_proj
    assert tags.shape == (N, T)
    assert jnp.allclose(tags, ref, atol=1e-5, rtol=1e-5)

    # ---- bf16 path: halves HBM bytes on the image and W streams ------------
    image_bf = image.astype(jnp.bfloat16)
    params_bf = prepare_head_params(w_proj, b_proj, param_dtype=jnp.bfloat16)
    out_bf = vision_model_forward(image_bf, params_bf["w"], params_bf["b"],
                                  num_tags=params_bf["num_tags"],
                                  tag_tile=params_bf["tag_tile"])
    tags_bf = jax.block_until_ready(out_bf["tags"])

    pooled_bf = jnp.mean(image_bf.astype(jnp.float32).reshape(N, C, H * Wd),
                         axis=-1)
    ref_bf = pooled_bf @ w_proj.astype(jnp.bfloat16).astype(jnp.float32) + b_proj
    assert tags_bf.shape == (N, T)
    assert jnp.allclose(tags_bf, ref_bf, atol=5e-3, rtol=5e-2)

    print("KERNEL_OK")
</pallas_src>

<mosaic_0001>
module attributes {stable_mosaic.version = 11 : i64} {
  func.func @_pool_kernel(%arg0: i32, %arg1: i32, %arg2: memref<8x256xf32, #tpu.memory_space<vmem>>, %arg3: memref<8x1xf32, #tpu.memory_space<vmem>>, %arg4: memref<8x128xf32, #tpu.memory_space<vmem>>) attributes {dimension_semantics = [#tpu.dimension_semantics<parallel>, #tpu.dimension_semantics<arbitrary>], iteration_bounds = array<i64: 1, 1>, scalar_prefetch = 0 : i64, scratch_operands = 1 : i64, tpu.core_type = #tpu.core_type<tc>, window_params = [{transform_indices = @transform_0, window_bounds = array<i64: 8, 256>}, {transform_indices = @transform_1, window_bounds = array<i64: 8, 1>}]} {
    %c0_i32 = arith.constant 0 : i32
    %0 = arith.cmpi eq, %arg1, %c0_i32 : i32
    %1 = arith.extui %0 : i1 to i32
    %c0_i32_0 = arith.constant 0 : i32
    %2 = arith.cmpi ne, %1, %c0_i32_0 : i32
    scf.if %2 {
      %cst_9 = arith.constant 0.000000e+00 : f32
      %14 = vector.broadcast %cst_9 : f32 to vector<8x128xf32>
      %c0_10 = arith.constant 0 : index
      %c0_11 = arith.constant 0 : index
      %15 = vector.load %arg4[%c0_10, %c0_11] : memref<8x128xf32, #tpu.memory_space<vmem>>, vector<8x128xf32>
      tpu.vector_store %arg4[%c0_10, %c0_11], %14 {strides = array<i32>} : memref<8x128xf32, #tpu.memory_space<vmem>>, vector<8x128xf32>,
    } else {
    }
    %cst = arith.constant 0.000000e+00 : f32
    %3 = vector.broadcast %cst : f32 to vector<8x128xf32>
    %c0 = arith.constant 0 : index
    %c0_1 = arith.constant 0 : index
    %4 = vector.load %arg2[%c0, %c0_1] : memref<8x256xf32, #tpu.memory_space<vmem>>, vector<8x128xf32>
    %5 = arith.addf %3, %4 : vector<8x128xf32>
    %c0_2 = arith.constant 0 : index
    %c128 = arith.constant 128 : index
    %6 = vector.load %arg2[%c0_2, %c128] : memref<8x256xf32, #tpu.memory_space<vmem>>, vector<8x128xf32>
    %7 = arith.addf %5, %6 : vector<8x128xf32>
    %c0_3 = arith.constant 0 : index
    %c0_4 = arith.constant 0 : index
    %8 = vector.load %arg4[%c0_3, %c0_4] : memref<8x128xf32, #tpu.memory_space<vmem>>, vector<8x128xf32>
    %9 = arith.addf %8, %7 : vector<8x128xf32>
    %c0_5 = arith.constant 0 : index
    %c0_6 = arith.constant 0 : index
    %10 = vector.load %arg4[%c0_5, %c0_6] : memref<8x128xf32, #tpu.memory_space<vmem>>, vector<8x128xf32>
    tpu.vector_store %arg4[%c0_5, %c0_6], %9 {strides = array<i32>} : memref<8x128xf32, #tpu.memory_space<vmem>>, vector<8x128xf32>,
    %c0_i32_7 = arith.constant 0 : i32
    %11 = arith.cmpi eq, %arg1, %c0_i32_7 : i32
    %12 = arith.extui %11 : i1 to i32
    %c0_i32_8 = arith.constant 0 : i32
    %13 = arith.cmpi ne, %12, %c0_i32_8 : i32
    scf.if %13 {
      %c0_9 = arith.constant 0 : index
      %c0_10 = arith.constant 0 : index
      %14 = vector.load %arg4[%c0_9, %c0_10] : memref<8x128xf32, #tpu.memory_space<vmem>>, vector<8x128xf32>
      %cst_11 = arith.constant dense<0.000000e+00> : vector<8xf32>
      %15 = vector.multi_reduction <add>, %14, %cst_11 [1] : vector<8x128xf32> to vector<8xf32>
      %16 = vector.shape_cast %15 : vector<8xf32> to vector<8x1xf32>
      %cst_12 = arith.constant 3.906250e-03 : f32
      %17 = vector.broadcast %cst_12 : f32 to vector<8x1xf32>
      %18 = arith.mulf %16, %17 : vector<8x1xf32>
      %c0_13 = arith.constant 0 : index
      %c0_14 = arith.constant 0 : index
      %19 = vector.load %arg3[%c0_13, %c0_14] : memref<8x1xf32, #tpu.memory_space<vmem>>, vector<8x1xf32>
      tpu.vector_store %arg3[%c0_13, %c0_14], %18 {strides = array<i32>} : memref<8x1xf32, #tpu.memory_space<vmem>>, vector<8x1xf32>,
    } else {
    }
    return
  }
  func.func @transform_0(%arg0: i32, %arg1: i32) -> (i32, i32) {
    %c0_i32 = arith.constant 0 : i32
    return %arg0, %arg1 : i32, i32
  }
  func.func @transform_1(%arg0: i32, %arg1: i32) -> (i32, i32) {
    %c0_i32 = arith.constant 0 : i32
    %c0_i32_0 = arith.constant 0 : i32
    return %arg0, %c0_i32 : i32, i32
  }
}

module attributes {stable_mosaic.version = 11 : i64} {
  func.func @_head_kernel(%arg0: i32, %arg1: memref<2x4xf32, #tpu.memory_space<vmem>>, %arg2: memref<4x512xf32, #tpu.memory_space<vmem>>, %arg3: memref<1x512xf32, #tpu.memory_space<vmem>>, %arg4: memref<2x512xf32, #tpu.memory_space<vmem>>) attributes {dimension_semantics = [#tpu.dimension_semantics<parallel>], iteration_bounds = array<i64: 1>, scalar_prefetch = 0 : i64, scratch_operands = 0 : i64, tpu.core_type = #tpu.core_type<tc>, window_params = [{pipeline_mode = #tpu.pipeline_mode<synchronous>, transform_indices = @transform_0, window_bounds = array<i64: 2, 4>}, {transform_indices = @transform_1, window_bounds = array<i64: 4, 512>}, {transform_indices = @transform_2, window_bounds = array<i64: 1, 512>}, {transform_indices = @transform_3, window_bounds = array<i64: 2, 512>}]} {
    %c0 = arith.constant 0 : index
    %c0_0 = arith.constant 0 : index
    %0 = vector.load %arg1[%c0, %c0_0] : memref<2x4xf32, #tpu.memory_space<vmem>>, vector<2x4xf32>
    %c0_1 = arith.constant 0 : index
    %c0_2 = arith.constant 0 : index
    %1 = vector.load %arg2[%c0_1, %c0_2] : memref<4x512xf32, #tpu.memory_space<vmem>>, vector<4x512xf32>
    %c0_3 = arith.constant 0 : index
    %c0_4 = arith.constant 0 : index
    %2 = vector.load %arg3[%c0_3, %c0_4] : memref<1x512xf32, #tpu.memory_space<vmem>>, vector<1x512xf32>
    %3 = vector.extract_strided_slice %0 {offsets = [0, 0], sizes = [2, 1], strides = [1, 1]} : vector<2x4xf32> to vector<2x1xf32>
    %4 = vector.extract_strided_slice %1 {offsets = [0, 0], sizes = [1, 512], strides = [1, 1]} : vector<4x512xf32> to vector<1x512xf32>
    %5 = vector.broadcast %3 : vector<2x1xf32> to vector<2x512xf32>
    %6 = vector.broadcast %4 : vector<1x512xf32> to vector<2x512xf32>
    %7 = arith.mulf %5, %6 : vector<2x512xf32>
    %8 = vector.extract_strided_slice %0 {offsets = [0, 1], sizes = [2, 1], strides = [1, 1]} : vector<2x4xf32> to vector<2x1xf32>
    %9 = vector.extract_strided_slice %1 {offsets = [1, 0], sizes = [1, 512], strides = [1, 1]} : vector<4x512xf32> to vector<1x512xf32>
    %10 = vector.broadcast %8 : vector<2x1xf32> to vector<2x512xf32>
    %11 = vector.broadcast %9 : vector<1x512xf32> to vector<2x512xf32>
    %12 = arith.mulf %10, %11 : vector<2x512xf32>
    %13 = arith.addf %7, %12 : vector<2x512xf32>
    %14 = vector.extract_strided_slice %0 {offsets = [0, 2], sizes = [2, 1], strides = [1, 1]} : vector<2x4xf32> to vector<2x1xf32>
    %15 = vector.extract_strided_slice %1 {offsets = [2, 0], sizes = [1, 512], strides = [1, 1]} : vector<4x512xf32> to vector<1x512xf32>
    %16 = vector.broadcast %14 : vector<2x1xf32> to vector<2x512xf32>
    %17 = vector.broadcast %15 : vector<1x512xf32> to vector<2x512xf32>
    %18 = arith.mulf %16, %17 : vector<2x512xf32>
    %19 = arith.addf %13, %18 : vector<2x512xf32>
    %20 = vector.extract_strided_slice %0 {offsets = [0, 3], sizes = [2, 1], strides = [1, 1]} : vector<2x4xf32> to vector<2x1xf32>
    %21 = vector.extract_strided_slice %1 {offsets = [3, 0], sizes = [1, 512], strides = [1, 1]} : vector<4x512xf32> to vector<1x512xf32>
    %22 = vector.broadcast %20 : vector<2x1xf32> to vector<2x512xf32>
    %23 = vector.broadcast %21 : vector<1x512xf32> to vector<2x512xf32>
    %24 = arith.mulf %22, %23 : vector<2x512xf32>
    %25 = arith.addf %19, %24 : vector<2x512xf32>
    %26 = vector.broadcast %2 : vector<1x512xf32> to vector<2x512xf32>
    %27 = arith.addf %25, %26 : vector<2x512xf32>
    %c0_5 = arith.constant 0 : index
    %c0_6 = arith.constant 0 : index
    %28 = vector.load %arg4[%c0_5, %c0_6] : memref<2x512xf32, #tpu.memory_space<vmem>>, vector<2x512xf32>
    tpu.vector_store %arg4[%c0_5, %c0_6], %27 {strides = array<i32>} : memref<2x512xf32, #tpu.memory_space<vmem>>, vector<2x512xf32>,
    return
  }
  func.func @transform_0(%arg0: i32) -> (i32, i32) {
    %c0_i32 = arith.constant 0 : i32
    %c0_i32_0 = arith.constant 0 : i32
    %c0_i32_1 = arith.constant 0 : i32
    return %c0_i32, %c0_i32_0 : i32, i32
  }
  func.func @transform_1(%arg0: i32) -> (i32, i32) {
    %c0_i32 = arith.constant 0 : i32
    %c0_i32_0 = arith.constant 0 : i32
    return %c0_i32, %arg0 : i32, i32
  }
  func.func @transform_2(%arg0: i32) -> (i32, i32) {
    %c0_i32 = arith.constant 0 : i32
    %c0_i32_0 = arith.constant 0 : i32
    return %c0_i32, %arg0 : i32, i32
  }
  func.func @transform_3(%arg0: i32) -> (i32, i32) {
    %c0_i32 = arith.constant 0 : i32
    %c0_i32_0 = arith.constant 0 : i32
    return %c0_i32, %arg0 : i32, i32
  }
}

</mosaic_0001>

<llo_original>
// kernel: vision_model_forward.3
$region0: #{vision_model_forward.3}
  #allocation0 [shape = 'u32[]', space=smem, size = 0x4, offset = 0x4, fixed_abs, tag = 'smem constant byte address 0x4 - core index']
  #allocation1 [shape = 'u32[144,128]{1,0:T(1,128)}', space=vmem, size = 0x12000, scoped, tag = 'internal scratch']
  %s0 = inlined_call_operand.vmem [shape: f32[2,4], index: 0, kind: input, shape index: {}]
  %s1 = inlined_call_operand.vmem [shape: f32[4,512], index: 1, kind: input, shape index: {}]
  %s2 = inlined_call_operand.vmem [shape: f32[1,512], index: 2, kind: input, shape index: {}]
  %s3 = inlined_call_operand.hbm [shape: f32[2,512], index: 3, kind: output, shape index: {}]
  %s4 = sld [smem:[#allocation0]]
  $region22: #{vision_model_forward.3} parent=0
    _
  %s6 = ssub.s32 1, %s4
  %s7 = scalar_select 0, %s6, %s4
  $region1: #{vision_model_forward.3} parent=0
    #allocation2 [shape = 'u8[4096]{0}', space=vmem, size = 0x1000, scoped, tag = 'output window, operand 0, single buffered']
    #allocation3 [shape = 's32[1]{0}', space=sflag, size = 0x4, scoped, tag = 'scoped memory for vision_model_forward.3']
    %8 = vsyncpa [#allocation3], 0
    // Predicated region
    $region2: #{vision_model_forward.3} parent=1 // pred_check
      _
    $region3: #{vision_model_forward.3} parent=1 // pred_check_branch
      %10 = sbr.rel (0) target = $region5
    $region4: #{vision_model_forward.3} parent=1 // pred_region
      _
    $region5: #{vision_model_forward.3} parent=1 // pred_fallthru
      _
    // Predicated region
    $region6: #{vision_model_forward.3} parent=1 // pred_check
      _
    $region7: #{vision_model_forward.3} parent=1 // pred_check_branch
      %12 = sbr.rel (0) target = $region9
    $region8: #{vision_model_forward.3} parent=1 // pred_region
      _
    $region9: #{vision_model_forward.3} parent=1 // pred_fallthru
      _
    // Predicated region
    $region10: #{vision_model_forward.3} parent=1 // pred_check
      _
    $region11: #{vision_model_forward.3} parent=1 // pred_check_branch
      %14 = sbr.rel (0) target = $region13
    $region12: #{vision_model_forward.3} parent=1 // pred_region
      _
    $region13: #{vision_model_forward.3} parent=1 // pred_fallthru
      _
    %v15 = vld [vmem:[%s0] sm:$0x3]
    %v16 = vld [vmem:[%s1] sm:$0xff]
    %v17 = vld [vmem:[%s1 + $0x8] sm:$0xff]
    %v18 = vld [vmem:[%s2] sm:$0xf]
    %20 = vset.pattern.permute.xlu0 0
    %21 = vperm.xlu0 %20, %v15
    %v22 = vpop.permute.xlu0 %21
    %v26 = vlaneseq
    %v27 = vshrl.u32 %v26, 7
    %v28 = vsub.s32 0, %v27
    %v29 = vrot.slane %v16, %v28
    %v30 = vlaneseq
    %v31 = vshrl.u32 %v30, 7
    %v32 = vsub.s32 4, %v31
    %v33 = vrot.slane %v16, %v32
    %v34 = vlaneseq
    %v35 = vshrl.u32 %v34, 7
    %v36 = vsub.s32 0, %v35
    %v37 = vrot.slane %v17, %v36
    %v38 = vlaneseq
    %v39 = vshrl.u32 %v38, 7
    %v40 = vsub.s32 4, %v39
    %v41 = vrot.slane %v17, %v40
    %v46 = vlaneseq
    %v47 = vshrl.u32 %v46, 7
    %v48 = vsub.s32 0, %v47
    %v49 = vrot.slane %v29, %v48
    %v50 = vlaneseq
    %v51 = vshrl.u32 %v50, 7
    %v52 = vsub.s32 0, %v51
    %v53 = vrot.slane %v33, %v52
    %v54 = vlaneseq
    %v55 = vshrl.u32 %v54, 7
    %v56 = vsub.s32 0, %v55
    %v57 = vrot.slane %v37, %v56
    %v58 = vlaneseq
    %v59 = vshrl.u32 %v58, 7
    %v60 = vsub.s32 0, %v59
    %v61 = vrot.slane %v41, %v60
    %v62 = vmul.f32 %v22, %v49
    %v63 = vmul.f32 %v22, %v53
    %v64 = vmul.f32 %v22, %v57
    %v65 = vmul.f32 %v22, %v61
    %66 = vset.pattern.permute.xlu0 1
    %67 = vperm.xlu0 %66, %v15
    %v68 = vpop.permute.xlu0 %67
    %v70 = vlaneseq
    %v71 = vshrl.u32 %v70, 7
    %v72 = vsub.s32 1, %v71
    %v73 = vrot.slane %v16, %v72
    %v74 = vlaneseq
    %v75 = vshrl.u32 %v74, 7
    %v76 = vsub.s32 5, %v75
    %v77 = vrot.slane %v16, %v76
    %v78 = vlaneseq
    %v79 = vshrl.u32 %v78, 7
    %v80 = vsub.s32 1, %v79
    %v81 = vrot.slane %v17, %v80
    %v82 = vlaneseq
    %v83 = vshrl.u32 %v82, 7
    %v84 = vsub.s32 5, %v83
    %v85 = vrot.slane %v17, %v84
    %v90 = vlaneseq
    %v91 = vshrl.u32 %v90, 7
    %v92 = vsub.s32 1, %v91
    %v93 = vrot.slane %v73, %v92
    %v94 = vlaneseq
    %v95 = vshrl.u32 %v94, 7
    %v96 = vsub.s32 1, %v95
    %v97 = vrot.slane %v77, %v96
    %v98 = vlaneseq
    %v99 = vshrl.u32 %v98, 7
    %v100 = vsub.s32 1, %v99
    %v101 = vrot.slane %v81, %v100
    %v102 = vlaneseq
    %v103 = vshrl.u32 %v102, 7
    %v104 = vsub.s32 1, %v103
    %v105 = vrot.slane %v85, %v104
    %v106 = vmul.f32 %v68, %v93
    %v107 = vmul.f32 %v68, %v97
    %v108 = vmul.f32 %v68, %v101
    %v109 = vmul.f32 %v68, %v105
    %v110 = vadd.f32 %v62, %v106
    %v111 = vadd.f32 %v63, %v107
    %v112 = vadd.f32 %v64, %v108
    %v113 = vadd.f32 %v65, %v109
    %114 = vset.pattern.permute.xlu0 2
    %115 = vperm.xlu0 %114, %v15
    %v116 = vpop.permute.xlu0 %115
    %v118 = vlaneseq
    %v119 = vshrl.u32 %v118, 7
    %v120 = vsub.s32 2, %v119
    %v121 = vrot.slane %v16, %v120
    %v122 = vlaneseq
    %v123 = vshrl.u32 %v122, 7
    %v124 = vsub.s32 6, %v123
    %v125 = vrot.slane %v16, %v124
    %v126 = vlaneseq
    %v127 = vshrl.u32 %v126, 7
    %v128 = vsub.s32 2, %v127
    %v129 = vrot.slane %v17, %v128
    %v130 = vlaneseq
    %v131 = vshrl.u32 %v130, 7
    %v132 = vsub.s32 6, %v131
    %v133 = vrot.slane %v17, %v132
    %v138 = vlaneseq
    %v139 = vshrl.u32 %v138, 7
    %v140 = vsub.s32 2, %v139
    %v141 = vrot.slane %v121, %v140
    %v142 = vlaneseq
    %v143 = vshrl.u32 %v142, 7
    %v144 = vsub.s32 2, %v143
    %v145 = vrot.slane %v125, %v144
    %v146 = vlaneseq
    %v147 = vshrl.u32 %v146, 7
    %v148 = vsub.s32 2, %v147
    %v149 = vrot.slane %v129, %v148
    %v150 = vlaneseq
    %v151 = vshrl.u32 %v150, 7
    %v152 = vsub.s32 2, %v151
    %v153 = vrot.slane %v133, %v152
    %v154 = vmul.f32 %v116, %v141
    %v155 = vmul.f32 %v116, %v145
    %v156 = vmul.f32 %v116, %v149
    %v157 = vmul.f32 %v116, %v153
    %v158 = vadd.f32 %v110, %v154
    %v159 = vadd.f32 %v111, %v155
    %v160 = vadd.f32 %v112, %v156
    %v161 = vadd.f32 %v113, %v157
    %162 = vset.pattern.permute.xlu0 3
    %163 = vperm.xlu0 %162, %v15
    %v164 = vpop.permute.xlu0 %163
    %v166 = vlaneseq
    %v167 = vshrl.u32 %v166, 7
    %v168 = vsub.s32 3, %v167
    %v169 = vrot.slane %v16, %v168
    %v170 = vlaneseq
    %v171 = vshrl.u32 %v170, 7
    %v172 = vsub.s32 7, %v171
    %v173 = vrot.slane %v16, %v172
    %v174 = vlaneseq
    %v175 = vshrl.u32 %v174, 7
    %v176 = vsub.s32 3, %v175
    %v177 = vrot.slane %v17, %v176
    %v178 = vlaneseq
    %v179 = vshrl.u32 %v178, 7
    %v180 = vsub.s32 7, %v179
    %v181 = vrot.slane %v17, %v180
    %v186 = vlaneseq
    %v187 = vshrl.u32 %v186, 7
    %v188 = vsub.s32 3, %v187
    %v189 = vrot.slane %v169, %v188
    %v190 = vlaneseq
    %v191 = vshrl.u32 %v190, 7
    %v192 = vsub.s32 3, %v191
    %v193 = vrot.slane %v173, %v192
    %v194 = vlaneseq
    %v195 = vshrl.u32 %v194, 7
    %v196 = vsub.s32 3, %v195
    %v197 = vrot.slane %v177, %v196
    %v198 = vlaneseq
    %v199 = vshrl.u32 %v198, 7
    %v200 = vsub.s32 3, %v199
    %v201 = vrot.slane %v181, %v200
    %v202 = vmul.f32 %v164, %v189
    %v203 = vmul.f32 %v164, %v193
    %v204 = vmul.f32 %v164, %v197
    %v205 = vmul.f32 %v164, %v201
    %v206 = vadd.f32 %v158, %v202
    %v207 = vadd.f32 %v159, %v203
    %v208 = vadd.f32 %v160, %v204
    %v209 = vadd.f32 %v161, %v205
    %v211 = vlaneseq
    %v212 = vshrl.u32 %v211, 7
    %v213 = vsub.s32 0, %v212
    %v214 = vrot.slane %v18, %v213
    %v215 = vlaneseq
    %v216 = vshrl.u32 %v215, 7
    %v217 = vsub.s32 1, %v216
    %v218 = vrot.slane %v18, %v217
    %v219 = vlaneseq
    %v220 = vshrl.u32 %v219, 7
    %v221 = vsub.s32 2, %v220
    %v222 = vrot.slane %v18, %v221
    %v223 = vlaneseq
    %v224 = vshrl.u32 %v223, 7
    %v225 = vsub.s32 3, %v224
    %v226 = vrot.slane %v18, %v225
    %v231 = vadd.f32 %v206, %v214
    %v232 = vadd.f32 %v207, %v218
    %v233 = vadd.f32 %v208, %v222
    %v234 = vadd.f32 %v209, %v226
    %v239 = vcombine.low %v231, %v232
    %v240 = vcombine.low %v233, %v234
    %v242 = vunpack.c.l.s4 1983009808
    %v243 = vunpack.c.0.s8 %v242
    %v244 = vlaneseq
    %v245 = vshrl.u32 %v244, 7
    %v246 = vsub.s32 %v243, %v245
    %v247 = vrot.slane %v239, %v246
    %v249 = vunpack.c.l.s4 1983009808
    %v250 = vunpack.c.0.s8 %v249
    %v251 = vlaneseq
    %v252 = vshrl.u32 %v251, 7
    %v253 = vsub.s32 %v250, %v252
    %v254 = vrot.slane %v240, %v253
    %v255 = vcombine.low %v247, %v254
    %257 = vst [vmem:[#allocation2] sm:$0xff] %v255
    // Predicated region
    $region14: #{vision_model_forward.3} parent=1 // pred_check
      _
    $region15: #{vision_model_forward.3} parent=1 // pred_check_branch
      %259 = sbr.rel (0) target = $region17
    $region16: #{vision_model_forward.3} parent=1 // pred_region
      %s261 = ssub.s32 128, 128
      %262 = vsyncadd [#allocation3], %s261
      %s264 = sshll.u32 [#allocation2], 4
      %s265 = int_to_ptr.vmem [resolvable:$true] %s264
      %267 = dma.vmem_to_hbm [thread:$0]  %s265, 128, %s3, [#allocation3]
    $region17: #{vision_model_forward.3} parent=1 // pred_fallthru
      _
    // Predicated region
    $region18: #{vision_model_forward.3} parent=1 // pred_check
      _
    $region19: #{vision_model_forward.3} parent=1 // pred_check_branch
      %269 = sbr.rel (0) target = $region21
    $region20: #{vision_model_forward.3} parent=1 // pred_region
      %270 = dma.done [#allocation3], 128
    $region21: #{vision_model_forward.3} parent=1 // pred_fallthru
      _
    %271 = vsyncpa [#allocation3], 1

// kernel: vision_model_forward.2
$region0: #{vision_model_forward.2}
  #allocation0 [shape = 'u32[]', space=smem, size = 0x4, offset = 0x4, fixed_abs, tag = 'smem constant byte address 0x4 - core index']
  #allocation1 [shape = 'u32[144,128]{1,0:T(1,128)}', space=vmem, size = 0x12000, scoped, tag = 'internal scratch']
  #allocation2 [shape = 'f32[8,128]{1,0:T(8,128)}', space=vmem, size = 0x1000, scoped, tag = 'scratch operand']
  %s0 = inlined_call_operand.vmem [shape: f32[8,256], index: 0, kind: input, shape index: {}]
  %s1 = inlined_call_operand.vmem [shape: f32[8,1], index: 1, kind: output, shape index: {}]
  %s2 = sld [smem:[#allocation0]]
  $region22: #{vision_model_forward.2} parent=0
    _
  %s4 = ssub.s32 1, %s2
  %s5 = scalar_select 0, %s4, %s2
  // Predicated region
  $region2: #{vision_model_forward.2} parent=0 // pred_check
    _
  $region3: #{vision_model_forward.2} parent=0 // pred_check_branch
    %7 = sbr.rel (0) target = $region5
  $region4: #{vision_model_forward.2} parent=0 // pred_region
    _
  $region5: #{vision_model_forward.2} parent=0 // pred_fallthru
    _
  %p8 = scmp.eq.s32.totalorder 0, 0
  // Predicated region
  $region6: #{vision_model_forward.2} parent=0 // pred_check
    %p9 = pneg %p8
  $region7: #{vision_model_forward.2} parent=0 // pred_check_branch
    %11 = sbr.rel (%p9) target = $region9
  $region8: #{vision_model_forward.2} parent=0 // pred_region
    %12 = vst [vmem:[#allocation2] sm:$0xff] 0.0
  $region9: #{vision_model_forward.2} parent=0 // pred_fallthru
    _
  %v13 = vld [vmem:[%s0] sm:$0xff]
  %v14 = vadd.f32 %v13, 0.0
  %v15 = vld [vmem:[%s0 + $0x8] sm:$0xff]
  %v16 = vadd.f32 %v14, %v15
  %v17 = vld [vmem:[#allocation2] sm:$0xff]
  %v18 = vadd.f32 %v17, %v16
  %19 = vst [vmem:[#allocation2] sm:$0xff] %v18
  // Predicated region
  $region10: #{vision_model_forward.2} parent=0 // pred_check
    %p20 = pneg %p8
  $region11: #{vision_model_forward.2} parent=0 // pred_check_branch
    %22 = sbr.rel (%p20) target = $region13
  $region12: #{vision_model_forward.2} parent=0 // pred_region
    %v23 = vld [vmem:[#allocation2] sm:$0xff]
    %24 = vadd.xlane.f32.xlu0 %v23
    %v25 = vpop.xlane.xlu0 %24
    %v26 = vmul.f32 %v25, 0.00390625
    %vm27 = vcmask 7168
    %28 = vst.msk [vmem:[%s1] sm:$0xff] %vm27, %v26
  $region13: #{vision_model_forward.2} parent=0 // pred_fallthru
    _
  // Predicated region
  $region14: #{vision_model_forward.2} parent=0 // pred_check
    _
  $region15: #{vision_model_forward.2} parent=0 // pred_check_branch
    %30 = sbr.rel (0) target = $region17
  $region16: #{vision_model_forward.2} parent=0 // pred_region
    _
  $region17: #{vision_model_forward.2} parent=0 // pred_fallthru
    _
  // Predicated region
  $region18: #{vision_model_forward.2} parent=0 // pred_check
    _
  $region19: #{vision_model_forward.2} parent=0 // pred_check_branch
    %32 = sbr.rel (0) target = $region21
  $region20: #{vision_model_forward.2} parent=0 // pred_region
    _
  $region21: #{vision_model_forward.2} parent=0 // pred_fallthru
    _

</llo_original>
